<compile_context>
chip_gen: v5e
topology: v5e:2x2
jax: 0.10.0
libtpu: 0.0.40
codegen_flags: <defaults>
</compile_context>

<pallas_src>
import functools
import math

import jax
import jax.numpy as jnp
from jax.experimental import pallas as pl
from jax.experimental.pallas import tpu as pltpu

EPS = 1e-6  # LayerNormalization eps = 10**-6


def _residual_kernel(x_ref, w_ref, b_ref, ab_ref, *rest, p):
    """One row tile: out = x + dropout((alpha*(x-mean)/(std+eps)+bias) @ W + b)."""
    if p > 0.0:
        bits_ref, o_ref = rest
    else:
        (o_ref,) = rest

    x = x_ref[...].astype(jnp.float32)                      # (tm, D)
    d = x.shape[-1]

    # --- LayerNormalization (torch x.std(dim=-1): unbiased var, eps added to std) ---
    mean = jnp.mean(x, axis=-1, keepdims=True)
    centered = x - mean
    var = jnp.sum(centered * centered, axis=-1, keepdims=True) * (1.0 / (d - 1))
    std = jnp.sqrt(var)
    alpha = ab_ref[0]                                       # learnable scalars (SMEM)
    bias = ab_ref[1]
    normed = alpha * centered / (std + EPS) + bias

    # --- sublayer: dense projection, bf16 MXU matmul with f32 accumulation ---
    y = jnp.dot(normed.astype(jnp.bfloat16), w_ref[...],
                preferred_element_type=jnp.float32)
    y = y + b_ref[...]                                      # (1, D) broadcast

    # --- dropout: integer-threshold compare on precomputed uint32 bits ---
    if p > 0.0:
        thresh = jnp.uint32(min(int(round(p * 2.0 ** 32)), 2 ** 32 - 1))
        keep = bits_ref[...] >= thresh                      # P(drop) == p
        y = jnp.where(keep, y * (1.0 / (1.0 - p)), 0.0)

    # --- residual add ---
    o_ref[...] = (x + y).astype(o_ref.dtype)


def residual_connection(x, w, b_lin, *, alpha=1.0, bias=0.0, dropout_p=0.0,
                        rng_key=None, tm=256, vmem_limit_bytes=56 * 1024 * 1024):
    """x: (B, S, D). w: (D, D). b_lin: (D,). Returns (B, S, D)."""
    B, S, D = x.shape
    N = B * S
    tm = min(tm, N)
    assert N % tm == 0, "B*S must be divisible by the row tile"
    # TODO(synk): pad N (to tm) and D (to 128 for lane-dense stores) for odd shapes.

    x2 = x.reshape(N, D)
    w_bf16 = w.astype(jnp.bfloat16)              # half VMEM/DMA bytes, MXU-peak dtype
    b2 = b_lin.reshape(1, D).astype(jnp.float32)
    ab = jnp.array([alpha, bias], dtype=jnp.float32)

    p = float(dropout_p)
    inputs = [x2, w_bf16, b2, ab]
    in_specs = [
        pl.BlockSpec((tm, D), lambda i: (i, 0)),                       # x row tile
        pl.BlockSpec((D, D), lambda i: (0, 0)),                        # W (resident, bf16)
        pl.BlockSpec((1, D), lambda i: (0, 0)),                        # linear bias
        pl.BlockSpec(memory_space=pltpu.MemorySpace.SMEM),             # [alpha, bias]
    ]
    bits_bytes = 0
    if p > 0.0:
        if rng_key is None:
            rng_key = jax.random.PRNGKey(0)
        bits = jax.random.bits(rng_key, (N, D), dtype=jnp.uint32)      # host-side RNG
        inputs.append(bits)
        in_specs.append(pl.BlockSpec((tm, D), lambda i: (i, 0)))
        bits_bytes = N * D * 4

    cost = pl.CostEstimate(
        flops=2 * N * D * D + 10 * N * D,
        transcendentals=N,                                   # sqrt per row
        bytes_accessed=2 * N * D * x.dtype.itemsize + D * D * 2 + D * 4 + bits_bytes,
    )

    out = pl.pallas_call(
        functools.partial(_residual_kernel, p=p),
        out_shape=jax.ShapeDtypeStruct((N, D), x.dtype),
        grid=(N // tm,),
        in_specs=in_specs,
        out_specs=pl.BlockSpec((tm, D), lambda i: (i, 0)),
        compiler_params=pltpu.CompilerParams(
            dimension_semantics=("parallel",),               # independent row tiles
            vmem_limit_bytes=vmem_limit_bytes,
        ),
        cost_estimate=cost,
    )(*inputs)
    return out.reshape(B, S, D)


if __name__ == "__main__":
    key = jax.random.PRNGKey(0)
    kx, kw, kb, kd = jax.random.split(key, 4)

    B, S, D = 2, 8, 32
    x = jax.random.normal(kx, (B, S, D), dtype=jnp.float32)
    w = jax.random.normal(kw, (D, D), dtype=jnp.float32) * (1.0 / math.sqrt(D))
    b_lin = jax.random.normal(kb, (D,), dtype=jnp.float32) * 0.02

    # Eval-mode (dropout p=0) correctness check vs pure-JAX reference that uses
    # the same bf16-matmul / f32-accumulate path as the kernel.
    out0 = jax.block_until_ready(residual_connection(x, w, b_lin, dropout_p=0.0))
    mean = jnp.mean(x, axis=-1, keepdims=True)
    var = jnp.sum((x - mean) ** 2, axis=-1, keepdims=True) / (D - 1)
    normed = 1.0 * (x - mean) / (jnp.sqrt(var) + EPS) + 0.0
    y_ref = jnp.dot(normed.astype(jnp.bfloat16), w.astype(jnp.bfloat16),
                    preferred_element_type=jnp.float32) + b_lin
    ref = x + y_ref
    assert jnp.allclose(out0, ref, atol=2e-3, rtol=2e-3), "mismatch vs reference"

    # Training-mode dropout run (mask bits generated host-side, applied in-kernel).
    out1 = jax.block_until_ready(
        residual_connection(x, w, b_lin, dropout_p=0.1, rng_key=kd))
    assert out1.shape == (B, S, D)
    assert bool(jnp.all(jnp.isfinite(out1)))

    print("KERNEL_OK")
</pallas_src>

<mosaic_0001>
module attributes {stable_mosaic.version = 11 : i64} {
  func.func @_residual_kernel(%arg0: i32, %arg1: memref<16x32xf32, #tpu.memory_space<vmem>>, %arg2: memref<32x32xbf16, #tpu.memory_space<vmem>>, %arg3: memref<1x32xf32, #tpu.memory_space<vmem>>, %arg4: memref<2xf32, #tpu.memory_space<smem>>, %arg5: memref<16x32xf32, #tpu.memory_space<vmem>>) attributes {dimension_semantics = [#tpu.dimension_semantics<parallel>], iteration_bounds = array<i64: 1>, scalar_prefetch = 0 : i64, scratch_operands = 0 : i64, tpu.core_type = #tpu.core_type<tc>, window_params = [{transform_indices = @transform_0, window_bounds = array<i64: 16, 32>}, {pipeline_mode = #tpu.pipeline_mode<synchronous>, transform_indices = @transform_1, window_bounds = array<i64: 32, 32>}, {pipeline_mode = #tpu.pipeline_mode<synchronous>, transform_indices = @transform_2, window_bounds = array<i64: 1, 32>}, {transform_indices = @transform_3, window_bounds = array<i64: 2>}, {transform_indices = @transform_4, window_bounds = array<i64: 16, 32>}]} {
    %c0 = arith.constant 0 : index
    %c0_0 = arith.constant 0 : index
    %0 = vector.load %arg1[%c0, %c0_0] : memref<16x32xf32, #tpu.memory_space<vmem>>, vector<16x32xf32>
    %cst = arith.constant dense<0.000000e+00> : vector<16xf32>
    %1 = vector.multi_reduction <add>, %0, %cst [1] : vector<16x32xf32> to vector<16xf32>
    %2 = vector.shape_cast %1 : vector<16xf32> to vector<16x1xf32>
    %cst_1 = arith.constant 3.200000e+01 : f32
    %3 = vector.broadcast %cst_1 : f32 to vector<16x1xf32>
    %4 = arith.divf %2, %3 : vector<16x1xf32>
    %5 = vector.broadcast %4 : vector<16x1xf32> to vector<16x32xf32>
    %6 = arith.subf %0, %5 : vector<16x32xf32>
    %7 = arith.mulf %6, %6 : vector<16x32xf32>
    %cst_2 = arith.constant dense<0.000000e+00> : vector<16xf32>
    %8 = vector.multi_reduction <add>, %7, %cst_2 [1] : vector<16x32xf32> to vector<16xf32>
    %9 = vector.shape_cast %8 : vector<16xf32> to vector<16x1xf32>
    %cst_3 = arith.constant 0.0322580636 : f32
    %10 = vector.broadcast %cst_3 : f32 to vector<16x1xf32>
    %11 = arith.mulf %9, %10 : vector<16x1xf32>
    %12 = math.sqrt %11 : vector<16x1xf32>
    %c0_4 = arith.constant 0 : index
    %13 = memref.load %arg4[%c0_4] : memref<2xf32, #tpu.memory_space<smem>>
    %c1 = arith.constant 1 : index
    %14 = memref.load %arg4[%c1] : memref<2xf32, #tpu.memory_space<smem>>
    %15 = vector.broadcast %13 : f32 to vector<16x32xf32>
    %16 = arith.mulf %15, %6 : vector<16x32xf32>
    %cst_5 = arith.constant 9.99999997E-7 : f32
    %17 = vector.broadcast %cst_5 : f32 to vector<16x1xf32>
    %18 = arith.addf %12, %17 : vector<16x1xf32>
    %19 = vector.broadcast %18 : vector<16x1xf32> to vector<16x32xf32>
    %20 = arith.divf %16, %19 : vector<16x32xf32>
    %21 = vector.broadcast %14 : f32 to vector<16x32xf32>
    %22 = arith.addf %20, %21 : vector<16x32xf32>
    %23 = arith.truncf %22 : vector<16x32xf32> to vector<16x32xbf16>
    %c0_6 = arith.constant 0 : index
    %c0_7 = arith.constant 0 : index
    %24 = vector.load %arg2[%c0_6, %c0_7] : memref<32x32xbf16, #tpu.memory_space<vmem>>, vector<32x32xbf16>
    %cst_8 = arith.constant dense<0.000000e+00> : vector<16x32xf32>
    %25 = tpu.matmul %23, %24, %cst_8 {dimension_numbers = #tpu.dot_dimension_numbers<[1], [0], [0], [1], [0, 0, 1, 1], [], []>} : vector<16x32xbf16>, vector<32x32xbf16>, vector<16x32xf32> -> vector<16x32xf32>
    %c0_9 = arith.constant 0 : index
    %c0_10 = arith.constant 0 : index
    %26 = vector.load %arg3[%c0_9, %c0_10] : memref<1x32xf32, #tpu.memory_space<vmem>>, vector<1x32xf32>
    %27 = vector.broadcast %26 : vector<1x32xf32> to vector<16x32xf32>
    %28 = arith.addf %25, %27 : vector<16x32xf32>
    %29 = arith.addf %0, %28 : vector<16x32xf32>
    %c0_11 = arith.constant 0 : index
    %c0_12 = arith.constant 0 : index
    %30 = vector.load %arg5[%c0_11, %c0_12] : memref<16x32xf32, #tpu.memory_space<vmem>>, vector<16x32xf32>
    tpu.vector_store %arg5[%c0_11, %c0_12], %29 {strides = array<i32>} : memref<16x32xf32, #tpu.memory_space<vmem>>, vector<16x32xf32>,
    return
  }
  func.func @transform_0(%arg0: i32) -> (i32, i32) {
    %c0_i32 = arith.constant 0 : i32
    %c0_i32_0 = arith.constant 0 : i32
    return %arg0, %c0_i32 : i32, i32
  }
  func.func @transform_1(%arg0: i32) -> (i32, i32) {
    %c0_i32 = arith.constant 0 : i32
    %c0_i32_0 = arith.constant 0 : i32
    %c0_i32_1 = arith.constant 0 : i32
    return %c0_i32, %c0_i32_0 : i32, i32
  }
  func.func @transform_2(%arg0: i32) -> (i32, i32) {
    %c0_i32 = arith.constant 0 : i32
    %c0_i32_0 = arith.constant 0 : i32
    %c0_i32_1 = arith.constant 0 : i32
    return %c0_i32, %c0_i32_0 : i32, i32
  }
  func.func @transform_3(%arg0: i32) -> i32 {
    %c0_i32 = arith.constant 0 : i32
    %c0_i32_0 = arith.constant 0 : i32
    return %c0_i32 : i32
  }
  func.func @transform_4(%arg0: i32) -> (i32, i32) {
    %c0_i32 = arith.constant 0 : i32
    %c0_i32_0 = arith.constant 0 : i32
    return %arg0, %c0_i32 : i32, i32
  }
}

</mosaic_0001>

<llo_original>
// kernel: tpu_custom_call.1
$region0: #{tpu_custom_call.1}
  #allocation0 [shape = 'u32[]', space=smem, size = 0x4, offset = 0x4, fixed_abs, tag = 'smem constant byte address 0x4 - core index']
  #allocation1 [shape = 'u32[72,128]{1,0:T(1,128)}', space=vmem, size = 0x9000, scoped, tag = 'internal scratch']
  %s0 = inlined_call_operand.hbm [shape: f32[16,32], index: 0, kind: input, shape index: {}]
  %s1 = inlined_call_operand.hbm [shape: bf16[32,32], index: 1, kind: input, shape index: {}]
  %s2 = inlined_call_operand.vmem [shape: f32[1,32], index: 2, kind: input, shape index: {}]
  %s3 = inlined_call_operand.vmem [shape: f32[2], index: 3, kind: input, shape index: {}]
  %s4 = inlined_call_operand.hbm [shape: f32[16,32], index: 4, kind: output, shape index: {}]
  %s5 = sld [smem:[#allocation0]]
  $region38: #{tpu_custom_call.1} parent=0
    _
  %s7 = ssub.s32 1, %s5
  %s8 = scalar_select 0, %s7, %s5
  $region1: #{tpu_custom_call.1} parent=0
    #allocation2 [shape = 'u8[8192]{0}', space=vmem, size = 0x2000, scoped, tag = 'input window, operand 0, single buffered']
    #allocation3 [shape = 's32[1]{0}', space=sflag, size = 0x4, scoped, tag = 'scoped memory for tpu_custom_call.1']
    #allocation4 [shape = 's32[1]{0}', space=sflag, size = 0x4, scoped, tag = 'scoped memory for tpu_custom_call.1']
    #allocation5 [shape = 's32[1]{0}', space=sflag, size = 0x4, scoped, tag = 'scoped memory for tpu_custom_call.1']
    #allocation6 [shape = 'u8[8192]{0}', space=vmem, size = 0x2000, scoped, tag = 'input window, operand 1, single buffered']
    #allocation7 [shape = 's32[1]{0}', space=sflag, size = 0x4, scoped, tag = 'scoped memory for tpu_custom_call.1']
    #allocation8 [shape = 'u8[512]{0}', space=smem, size = 0x200, scoped, tag = 'input window, operand 3, single buffered']
    #allocation9 [shape = 'u8[8192]{0}', space=vmem, size = 0x2000, scoped, tag = 'output window, operand 0, single buffered']
    %9 = vsyncpa [#allocation3], 0
    %10 = vsyncpa [#allocation7], 0
    %11 = vsyncpa [#allocation5], 0
    %12 = vsyncpa [#allocation4], 0
    // Predicated region
    $region2: #{tpu_custom_call.1} parent=1 // pred_check
      _
    $region3: #{tpu_custom_call.1} parent=1 // pred_check_branch
      %14 = sbr.rel (0) target = $region5
    $region4: #{tpu_custom_call.1} parent=1 // pred_region
      %16 = vsyncadd [#allocation3], 0
      %s17 = sshll.u32 %s0, 4
      %s18 = int_to_ptr.hbm [resolvable:$true] %s17
      %s19 = sshll.u32 [#allocation2], 4
      %s20 = int_to_ptr.vmem [resolvable:$true] %s19
      %25 = dma.hbm_to_vmem [thread:$0]  %s18, 256, %s20, [#allocation3], 128, 128, 8
    $region5: #{tpu_custom_call.1} parent=1 // pred_fallthru
      _
    // Predicated region
    $region6: #{tpu_custom_call.1} parent=1 // pred_check
      _
    $region7: #{tpu_custom_call.1} parent=1 // pred_check_branch
      %27 = sbr.rel (0) target = $region9
    $region8: #{tpu_custom_call.1} parent=1 // pred_region
      %29 = vsyncadd [#allocation7], 0
      %s30 = sshll.u32 %s1, 4
      %s31 = int_to_ptr.hbm [resolvable:$true] %s30
      %s32 = sshll.u32 [#allocation6], 4
      %s33 = int_to_ptr.vmem [resolvable:$true] %s32
      %38 = dma.hbm_to_vmem [thread:$0]  %s31, 256, %s33, [#allocation7], 64, 64, 4
    $region9: #{tpu_custom_call.1} parent=1 // pred_fallthru
      _
    // Predicated region
    $region10: #{tpu_custom_call.1} parent=1 // pred_check
      _
    $region11: #{tpu_custom_call.1} parent=1 // pred_check_branch
      %40 = sbr.rel (0) target = $region13
    $region12: #{tpu_custom_call.1} parent=1 // pred_region
      _
    $region13: #{tpu_custom_call.1} parent=1 // pred_fallthru
      _
    // Predicated region
    $region14: #{tpu_custom_call.1} parent=1 // pred_check
      _
    $region15: #{tpu_custom_call.1} parent=1 // pred_check_branch
      %42 = sbr.rel (0) target = $region17
    $region16: #{tpu_custom_call.1} parent=1 // pred_region
      %44 = vsyncadd [#allocation5], 0
      %s46 = sshll.u32 %s3, 4
      %s47 = int_to_ptr.vmem [resolvable:$true] %s46
      %49 = dma.vmem_to_smem %s47, 16, [#allocation8], [#allocation5]
    $region17: #{tpu_custom_call.1} parent=1 // pred_fallthru
      _
    // Predicated region
    $region18: #{tpu_custom_call.1} parent=1 // pred_check
      _
    $region19: #{tpu_custom_call.1} parent=1 // pred_check_branch
      %51 = sbr.rel (0) target = $region21
    $region20: #{tpu_custom_call.1} parent=1 // pred_region
      %53 = dma.done [#allocation3], 256
    $region21: #{tpu_custom_call.1} parent=1 // pred_fallthru
      _
    // Predicated region
    $region22: #{tpu_custom_call.1} parent=1 // pred_check
      _
    $region23: #{tpu_custom_call.1} parent=1 // pred_check_branch
      %55 = sbr.rel (0) target = $region25
    $region24: #{tpu_custom_call.1} parent=1 // pred_region
      %57 = dma.done [#allocation7], 256
    $region25: #{tpu_custom_call.1} parent=1 // pred_fallthru
      _
    // Predicated region
    $region26: #{tpu_custom_call.1} parent=1 // pred_check
      _
    $region27: #{tpu_custom_call.1} parent=1 // pred_check_branch
      %59 = sbr.rel (0) target = $region29
    $region28: #{tpu_custom_call.1} parent=1 // pred_region
      %61 = dma.done [#allocation5], 16
    $region29: #{tpu_custom_call.1} parent=1 // pred_fallthru
      _
    %62 = sfence
    %v64 = vld [vmem:[#allocation2] sm:$0xff]
    %v65 = vld [vmem:[#allocation2 + $0x8] sm:$0xff]
    %vm66 = vcmask 261120
    %v67 = vsel %vm66, %v64, 0.0
    %68 = vadd.xlane.f32.xlu0 %v67
    %v69 = vpop.xlane.xlu0 %68
    %v70 = vsel %vm66, %v65, 0.0
    %71 = vadd.xlane.f32.xlu0 %v70
    %v72 = vpop.xlane.xlu0 %71
    %v73 = vrcp.pop 32.0
    %v74 = vmul.f32 32.0, %v73
    %v75 = vsub.f32 1.0, %v74
    %v76 = vmul.f32 %v73, %v75
    %v77 = vadd.f32 %v73, %v76
    %vm78 = vweird.f32 %v73
    %v79 = vsel %vm78, %v73, %v77
    %v80 = vmul.f32 %v69, %v79
    %v81 = vmul.f32 %v72, %v79
    %v82 = vsub.f32 %v64, %v80
    %v83 = vsub.f32 %v65, %v81
    %v84 = vmul.f32 %v82, %v82
    %v85 = vmul.f32 %v83, %v83
    %v86 = vsel %vm66, %v84, 0.0
    %87 = vadd.xlane.f32.xlu0 %v86
    %v88 = vpop.xlane.xlu0 %87
    %v89 = vsel %vm66, %v85, 0.0
    %90 = vadd.xlane.f32.xlu0 %v89
    %v91 = vpop.xlane.xlu0 %90
    %v92 = vmul.f32 %v88, 0.032258064
    %v93 = vmul.f32 %v91, 0.032258064
    %v94 = vrsqrt.pop %v92
    %v95 = vmul.f32 %v94, %v92
    %v96 = vmul.f32 %v95, %v94
    %v97 = vmul.f32 0.5, %v96
    %v98 = vsub.f32 1.5, %v97
    %v99 = vmul.f32 %v94, %v98
    %v100 = vmul.f32 %v92, %v99
    %vm101 = vcmp.eq.f32.partialorder %v92, inf
    %v102 = vsel %vm101, %v92, %v100
    %vm103 = vcmp.eq.f32.partialorder %v92, 0.0
    %v104 = vand.u32 %v92, 2147483648
    %v105 = vsel %vm103, %v104, %v102
    %v106 = vrsqrt.pop %v93
    %v107 = vmul.f32 %v106, %v93
    %v108 = vmul.f32 %v107, %v106
    %v109 = vmul.f32 0.5, %v108
    %v110 = vsub.f32 1.5, %v109
    %v111 = vmul.f32 %v106, %v110
    %v112 = vmul.f32 %v93, %v111
    %vm113 = vcmp.eq.f32.partialorder %v93, inf
    %v114 = vsel %vm113, %v93, %v112
    %vm115 = vcmp.eq.f32.partialorder %v93, 0.0
    %v116 = vand.u32 %v93, 2147483648
    %v117 = vsel %vm115, %v116, %v114
    %s118 = sld [smem:[#allocation8]]
    %s119 = sld [smem:[#allocation8 + $0x1]]
    %v120 = vstv %s118
    %v121 = vmul.f32 %v120, %v82
    %v122 = vmul.f32 %v120, %v83
    %v123 = vadd.f32 %v105, 1e-06
    %v124 = vadd.f32 %v117, 1e-06
    %v125 = vrcp.pop %v123
    %v126 = vmul.f32 %v123, %v125
    %v127 = vsub.f32 1.0, %v126
    %v128 = vmul.f32 %v125, %v127
    %v129 = vadd.f32 %v125, %v128
    %vm130 = vweird.f32 %v123
    %vm131 = vweird.f32 %v125
    %vm132 = vmor %vm130, %vm131
    %v133 = vsel %vm132, %v125, %v129
    %v134 = vand.u32 2147483647, %v123
    %vm135 = vcmp.eq.f32.partialorder %v134, 8.507059e+37
    %v136 = vand.u32 %v123, 2147483648
    %v137 = vor.u32 1.1754944e-38, %v136
    %v138 = vsel %vm135, %v137, %v133
    %v139 = vmul.f32 %v121, %v138
    %v140 = vrcp.pop %v124
    %v141 = vmul.f32 %v124, %v140
    %v142 = vsub.f32 1.0, %v141
    %v143 = vmul.f32 %v140, %v142
    %v144 = vadd.f32 %v140, %v143
    %vm145 = vweird.f32 %v124
    %vm146 = vweird.f32 %v140
    %vm147 = vmor %vm145, %vm146
    %v148 = vsel %vm147, %v140, %v144
    %v149 = vand.u32 2147483647, %v124
    %vm150 = vcmp.eq.f32.partialorder %v149, 8.507059e+37
    %v151 = vand.u32 %v124, 2147483648
    %v152 = vor.u32 1.1754944e-38, %v151
    %v153 = vsel %vm150, %v152, %v148
    %v154 = vmul.f32 %v122, %v153
    %v155 = vstv %s119
    %v156 = vadd.f32 %v139, %v155
    %v157 = vadd.f32 %v154, %v155
    %v158 = vpack.c.bf16 %v157, %v156
    %v159 = vld [vmem:[#allocation6] sm:$0xf]
    %v160 = vld [vmem:[#allocation6 + $0x4] sm:$0xf]
    %v161 = vld [vmem:[#allocation6 + $0x8] sm:$0xf]
    %v162 = vld [vmem:[#allocation6 + $0xc] sm:$0xf]
    %v163 = vld [vmem:[%s2] sm:$0x1]
    %v165 = vperm.slane %v163, 0
    %v171 = vunpack.c.l.b16 %v159
    %v172 = vunpack.c.l.b16 %v160
    %v173 = vunpack.c.l.b16 %v161
    %v174 = vunpack.c.l.b16 %v162
    %v175 = vpack.c.b16 %v172, %v171
    %v176 = vpack.c.b16 %v174, %v173
    %v180 = vsel %vm66, %v158, 0
    %182 = vmatpush.bf16.msra.mxu0 0
    %183 = vmatpush.bf16.msra.mxu0 0
    %184 = vmatpush.bf16.msra.mxu0 0
    %185 = vmatpush.bf16.msra.mxu0 0
    %186 = vmatpush.bf16.msra.mxu0 0
    %187 = vmatpush.bf16.msra.mxu0 0
    %188 = vmatpush.bf16.msra.mxu0 %v176
    %189 = vmatpush.bf16.msra.mxu0 %v175
    %190 = vmatmul.bf16.gmra.mxu0 %v180
    %v191 = vpop.f32.mrf.mxu0
    %v192 = vadd.f32 %v165, %v191
    %v193 = vpop.f32.mrf.mxu0
    %v194 = vadd.f32 %v165, %v193
    %195 = vdwg.mxu0
    %v196 = vadd.f32 %v64, %v192
    %v197 = vadd.f32 %v65, %v194
    %198 = vst.msk [vmem:[#allocation9] sm:$0xff] %vm66, %v196
    %199 = vst.msk [vmem:[#allocation9 + $0x8] sm:$0xff] %vm66, %v197
    // Predicated region
    $region30: #{tpu_custom_call.1} parent=1 // pred_check
      _
    $region31: #{tpu_custom_call.1} parent=1 // pred_check_branch
      %201 = sbr.rel (0) target = $region33
    $region32: #{tpu_custom_call.1} parent=1 // pred_region
      %203 = vsyncadd [#allocation4], 0
      %s204 = sshll.u32 [#allocation9], 4
      %s205 = int_to_ptr.vmem [resolvable:$true] %s204
      %s206 = sshll.u32 %s4, 4
      %s207 = int_to_ptr.hbm [resolvable:$true] %s206
      %212 = dma.vmem_to_hbm [thread:$0]  %s205, 256, %s207, [#allocation4], 128, 128, 8
    $region33: #{tpu_custom_call.1} parent=1 // pred_fallthru
      _
    // Predicated region
    $region34: #{tpu_custom_call.1} parent=1 // pred_check
      _
    $region35: #{tpu_custom_call.1} parent=1 // pred_check_branch
      %214 = sbr.rel (0) target = $region37
    $region36: #{tpu_custom_call.1} parent=1 // pred_region
      %216 = dma.done [#allocation4], 256
    $region37: #{tpu_custom_call.1} parent=1 // pred_fallthru
      _
    %217 = vsyncpa [#allocation3], 1
    %218 = vsyncpa [#allocation7], 1
    %219 = vsyncpa [#allocation4], 1
    %220 = vsyncpa [#allocation5], 1

</llo_original>
